<compile_context>
chip_gen: v5e
topology: v5e:2x2
jax: 0.10.0
libtpu: 0.0.40
codegen_flags: <defaults>
</compile_context>

<pallas_src>
import jax
import jax.numpy as jnp
from jax.experimental import pallas as pl
from jax.experimental.pallas import tpu as pltpu


def _round_up(n: int, m: int) -> int:
    return ((n + m - 1) // m) * m


def policy_net_kernel(x_ref, w1_ref, b1_ref, w2_ref, b2_ref, o_ref):
    # fc1 + ReLU: bf16 operands on the MXU, f32 accumulate / elementwise.
    h = jnp.dot(x_ref[...], w1_ref[...], preferred_element_type=jnp.float32)
    h = jnp.maximum(h + b1_ref[...], 0.0)             # b1 [1,H] broadcasts over batch

    # fc2: cast activations to bf16 for the MXU, keep f32 accumulation.
    logits = jnp.dot(h.astype(jnp.bfloat16), w2_ref[...],
                     preferred_element_type=jnp.float32)
    logits = logits + b2_ref[...]                     # padded columns carry -1e30

    # Numerically stable softmax over the (padded) action dim; padded columns
    # underflow to exactly 0 and do not contribute to the denominator.
    m = jnp.max(logits, axis=-1, keepdims=True)
    e = jnp.exp(logits - m)
    denom = jnp.sum(e, axis=-1, keepdims=True)
    o_ref[...] = (e * pl.reciprocal(denom, approx=True)).astype(o_ref.dtype)


def policy_net_forward(x, w1, b1, w2, b2, *, block_b: int = 512):
    """x: [B, state_dim]; w1: [state_dim, hidden]; b1: [1, hidden];
    w2: [hidden, action]; b2: [1, action]  (weights stored transposed vs PyTorch).
    Returns softmax probabilities [B, action_dim] in f32."""
    B, state_dim = x.shape
    hidden_dim, action_dim = w2.shape
    LANE = 128

    # --- lane-dense output: pad action dim to a full 128-lane register -------
    a_pad = _round_up(action_dim, LANE)
    w2_p = jnp.zeros((hidden_dim, a_pad), jnp.float32).at[:, :action_dim].set(
        w2.astype(jnp.float32))
    b2_p = jnp.full((1, a_pad), -1e30, jnp.float32).at[:, :action_dim].set(
        b2.astype(jnp.float32))

    # --- batch tiling (rows per grid step, multiple of 8 sublanes) ----------
    tb = min(block_b, _round_up(B, 8))
    b_pad = _round_up(B, tb)
    if b_pad != B:
        x = jnp.pad(x, ((0, b_pad - B), (0, 0)))
    grid = (b_pad // tb,)

    # --- bf16 MXU operands (halves x/W DMA traffic); biases stay f32 ---------
    x_bf = x.astype(jnp.bfloat16)
    w1_bf = w1.astype(jnp.bfloat16)
    w2_bf = w2_p.astype(jnp.bfloat16)
    b1_f = b1.astype(jnp.float32)

    out = pl.pallas_call(
        policy_net_kernel,
        out_shape=jax.ShapeDtypeStruct((b_pad, a_pad), jnp.float32),
        grid=grid,
        in_specs=[
            pl.BlockSpec((tb, state_dim), lambda i: (i, 0)),          # x: pipelined
            pl.BlockSpec((state_dim, hidden_dim), lambda i: (0, 0)),  # w1: resident
            pl.BlockSpec((1, hidden_dim), lambda i: (0, 0)),          # b1: resident
            pl.BlockSpec((hidden_dim, a_pad), lambda i: (0, 0)),      # w2: resident
            pl.BlockSpec((1, a_pad), lambda i: (0, 0)),               # b2: resident
        ],
        out_specs=pl.BlockSpec((tb, a_pad), lambda i: (i, 0)),
        compiler_params=pltpu.CompilerParams(
            dimension_semantics=("parallel",)),        # megacore on v7x
    )(x_bf, w1_bf, b1_f, w2_bf, b2_p)

    return out[:B, :action_dim]


def init_params(key, state_dim, hidden_dim, action_dim):
    """Synthetic init mirroring the PyTorch module: kaiming_normal_ (fan_in,
    relu gain) for weights, PyTorch-default uniform for biases."""
    k1, k2, k3, k4 = jax.random.split(key, 4)
    w1 = jax.random.normal(k1, (state_dim, hidden_dim), jnp.float32) * jnp.sqrt(
        2.0 / state_dim)
    w2 = jax.random.normal(k2, (hidden_dim, action_dim), jnp.float32) * jnp.sqrt(
        2.0 / hidden_dim)
    b1 = jax.random.uniform(
        k3, (1, hidden_dim), jnp.float32,
        minval=-1.0 / jnp.sqrt(state_dim), maxval=1.0 / jnp.sqrt(state_dim))
    b2 = jax.random.uniform(
        k4, (1, action_dim), jnp.float32,
        minval=-1.0 / jnp.sqrt(hidden_dim), maxval=1.0 / jnp.sqrt(hidden_dim))
    return w1, b1, w2, b2


if __name__ == "__main__":
    # Small shapes consistent with forward(): state [B, state_dim]
    B, state_dim, hidden_dim, action_dim = 8, 16, 32, 8

    key = jax.random.PRNGKey(0)
    kx, kp = jax.random.split(key)
    x = jax.random.normal(kx, (B, state_dim), jnp.float32)
    w1, b1, w2, b2 = init_params(kp, state_dim, hidden_dim, action_dim)

    out = jax.block_until_ready(policy_net_forward(x, w1, b1, w2, b2))

    # Reference matched to the kernel's matmul precision (bf16 operands,
    # f32 accumulation / softmax).
    xb = x.astype(jnp.bfloat16).astype(jnp.float32)
    w1b = w1.astype(jnp.bfloat16).astype(jnp.float32)
    w2b = w2.astype(jnp.bfloat16).astype(jnp.float32)
    h_m = jnp.maximum(xb @ w1b + b1, 0.0)
    ref_matched = jax.nn.softmax(
        h_m.astype(jnp.bfloat16).astype(jnp.float32) @ w2b + b2, axis=1)
    # Full-f32 reference (same math path as the PyTorch module).
    ref_f32 = jax.nn.softmax(jnp.maximum(x @ w1 + b1, 0.0) @ w2 + b2, axis=1)

    assert out.shape == (B, action_dim)
    assert jnp.allclose(out, ref_matched, atol=5e-3, rtol=5e-3), \
        float(jnp.max(jnp.abs(out - ref_matched)))
    assert jnp.allclose(out, ref_f32, atol=3e-2, rtol=3e-2), \
        float(jnp.max(jnp.abs(out - ref_f32)))
    # probabilities sum to 1 along dim=1 (up to bf16 / approx-reciprocal rounding)
    assert jnp.allclose(jnp.sum(out, axis=1), 1.0, atol=5e-3)

    print("KERNEL_OK")
</pallas_src>

<mosaic_0001>
module attributes {stable_mosaic.version = 11 : i64} {
  func.func @policy_net_kernel(%arg0: i32, %arg1: memref<8x16xbf16, #tpu.memory_space<vmem>>, %arg2: memref<16x32xbf16, #tpu.memory_space<vmem>>, %arg3: memref<1x32xf32, #tpu.memory_space<vmem>>, %arg4: memref<32x128xbf16, #tpu.memory_space<vmem>>, %arg5: memref<1x128xf32, #tpu.memory_space<vmem>>, %arg6: memref<8x128xf32, #tpu.memory_space<vmem>>) attributes {dimension_semantics = [#tpu.dimension_semantics<parallel>], iteration_bounds = array<i64: 1>, scalar_prefetch = 0 : i64, scratch_operands = 0 : i64, tpu.core_type = #tpu.core_type<tc>, window_params = [{transform_indices = @transform_0, window_bounds = array<i64: 8, 16>}, {pipeline_mode = #tpu.pipeline_mode<synchronous>, transform_indices = @transform_1, window_bounds = array<i64: 16, 32>}, {pipeline_mode = #tpu.pipeline_mode<synchronous>, transform_indices = @transform_2, window_bounds = array<i64: 1, 32>}, {pipeline_mode = #tpu.pipeline_mode<synchronous>, transform_indices = @transform_3, window_bounds = array<i64: 32, 128>}, {pipeline_mode = #tpu.pipeline_mode<synchronous>, transform_indices = @transform_4, window_bounds = array<i64: 1, 128>}, {transform_indices = @transform_5, window_bounds = array<i64: 8, 128>}]} {
    %c0 = arith.constant 0 : index
    %c0_0 = arith.constant 0 : index
    %0 = vector.load %arg1[%c0, %c0_0] : memref<8x16xbf16, #tpu.memory_space<vmem>>, vector<8x16xbf16>
    %c0_1 = arith.constant 0 : index
    %c0_2 = arith.constant 0 : index
    %1 = vector.load %arg2[%c0_1, %c0_2] : memref<16x32xbf16, #tpu.memory_space<vmem>>, vector<16x32xbf16>
    %cst = arith.constant dense<0.000000e+00> : vector<8x32xf32>
    %2 = tpu.matmul %0, %1, %cst {dimension_numbers = #tpu.dot_dimension_numbers<[1], [0], [0], [1], [0, 0, 1, 1], [], []>} : vector<8x16xbf16>, vector<16x32xbf16>, vector<8x32xf32> -> vector<8x32xf32>
    %c0_3 = arith.constant 0 : index
    %c0_4 = arith.constant 0 : index
    %3 = vector.load %arg3[%c0_3, %c0_4] : memref<1x32xf32, #tpu.memory_space<vmem>>, vector<1x32xf32>
    %4 = vector.broadcast %3 : vector<1x32xf32> to vector<8x32xf32>
    %5 = arith.addf %2, %4 : vector<8x32xf32>
    %cst_5 = arith.constant 0.000000e+00 : f32
    %6 = vector.broadcast %cst_5 : f32 to vector<8x32xf32>
    %7 = arith.maximumf %5, %6 : vector<8x32xf32>
    %8 = arith.truncf %7 : vector<8x32xf32> to vector<8x32xbf16>
    %c0_6 = arith.constant 0 : index
    %c0_7 = arith.constant 0 : index
    %9 = vector.load %arg4[%c0_6, %c0_7] : memref<32x128xbf16, #tpu.memory_space<vmem>>, vector<32x128xbf16>
    %cst_8 = arith.constant dense<0.000000e+00> : vector<8x128xf32>
    %10 = tpu.matmul %8, %9, %cst_8 {dimension_numbers = #tpu.dot_dimension_numbers<[1], [0], [0], [1], [0, 0, 1, 1], [], []>} : vector<8x32xbf16>, vector<32x128xbf16>, vector<8x128xf32> -> vector<8x128xf32>
    %c0_9 = arith.constant 0 : index
    %c0_10 = arith.constant 0 : index
    %11 = vector.load %arg5[%c0_9, %c0_10] : memref<1x128xf32, #tpu.memory_space<vmem>>, vector<1x128xf32>
    %12 = vector.broadcast %11 : vector<1x128xf32> to vector<8x128xf32>
    %13 = arith.addf %10, %12 : vector<8x128xf32>
    %cst_11 = arith.constant dense<0xFF800000> : vector<8xf32>
    %14 = vector.multi_reduction <maximumf>, %13, %cst_11 [1] : vector<8x128xf32> to vector<8xf32>
    %15 = vector.shape_cast %14 : vector<8xf32> to vector<8x1xf32>
    %16 = vector.broadcast %15 : vector<8x1xf32> to vector<8x128xf32>
    %17 = arith.subf %13, %16 : vector<8x128xf32>
    %18 = math.exp %17 : vector<8x128xf32>
    %cst_12 = arith.constant dense<0.000000e+00> : vector<8xf32>
    %19 = vector.multi_reduction <add>, %18, %cst_12 [1] : vector<8x128xf32> to vector<8xf32>
    %20 = vector.shape_cast %19 : vector<8xf32> to vector<8x1xf32>
    %21 = tpu.reciprocal %20 {approx = true} : vector<8x1xf32> -> vector<8x1xf32>
    %22 = vector.broadcast %21 : vector<8x1xf32> to vector<8x128xf32>
    %23 = arith.mulf %18, %22 : vector<8x128xf32>
    %c0_13 = arith.constant 0 : index
    %c0_14 = arith.constant 0 : index
    %24 = vector.load %arg6[%c0_13, %c0_14] : memref<8x128xf32, #tpu.memory_space<vmem>>, vector<8x128xf32>
    tpu.vector_store %arg6[%c0_13, %c0_14], %23 {strides = array<i32>} : memref<8x128xf32, #tpu.memory_space<vmem>>, vector<8x128xf32>,
    return
  }
  func.func @transform_0(%arg0: i32) -> (i32, i32) {
    %c0_i32 = arith.constant 0 : i32
    %c0_i32_0 = arith.constant 0 : i32
    return %arg0, %c0_i32 : i32, i32
  }
  func.func @transform_1(%arg0: i32) -> (i32, i32) {
    %c0_i32 = arith.constant 0 : i32
    %c0_i32_0 = arith.constant 0 : i32
    %c0_i32_1 = arith.constant 0 : i32
    return %c0_i32, %c0_i32_0 : i32, i32
  }
  func.func @transform_2(%arg0: i32) -> (i32, i32) {
    %c0_i32 = arith.constant 0 : i32
    %c0_i32_0 = arith.constant 0 : i32
    %c0_i32_1 = arith.constant 0 : i32
    return %c0_i32, %c0_i32_0 : i32, i32
  }
  func.func @transform_3(%arg0: i32) -> (i32, i32) {
    %c0_i32 = arith.constant 0 : i32
    %c0_i32_0 = arith.constant 0 : i32
    %c0_i32_1 = arith.constant 0 : i32
    return %c0_i32, %c0_i32_0 : i32, i32
  }
  func.func @transform_4(%arg0: i32) -> (i32, i32) {
    %c0_i32 = arith.constant 0 : i32
    %c0_i32_0 = arith.constant 0 : i32
    %c0_i32_1 = arith.constant 0 : i32
    return %c0_i32, %c0_i32_0 : i32, i32
  }
  func.func @transform_5(%arg0: i32) -> (i32, i32) {
    %c0_i32 = arith.constant 0 : i32
    %c0_i32_0 = arith.constant 0 : i32
    return %arg0, %c0_i32 : i32, i32
  }
}

</mosaic_0001>

<llo_original>
// kernel: tpu_custom_call.1
$region0: #{tpu_custom_call.1}
  #allocation0 [shape = 'u32[]', space=smem, size = 0x4, offset = 0x4, fixed_abs, tag = 'smem constant byte address 0x4 - core index']
  #allocation1 [shape = 'u32[72,128]{1,0:T(1,128)}', space=vmem, size = 0x9000, scoped, tag = 'internal scratch']
  %s0 = inlined_call_operand.hbm [shape: bf16[8,16], index: 0, kind: input, shape index: {}]
  %s1 = inlined_call_operand.hbm [shape: bf16[16,32], index: 1, kind: input, shape index: {}]
  %s2 = inlined_call_operand.vmem [shape: f32[1,32], index: 2, kind: input, shape index: {}]
  %s3 = inlined_call_operand.hbm [shape: bf16[32,128], index: 3, kind: input, shape index: {}]
  %s4 = inlined_call_operand.vmem [shape: f32[1,128], index: 4, kind: input, shape index: {}]
  %s5 = inlined_call_operand.hbm [shape: f32[8,128], index: 5, kind: output, shape index: {}]
  %s6 = sld [smem:[#allocation0]]
  $region42: #{tpu_custom_call.1} parent=0
    _
  %s8 = ssub.s32 1, %s6
  %s9 = scalar_select 0, %s8, %s6
  $region1: #{tpu_custom_call.1} parent=0
    #allocation2 [shape = 'u8[2048]{0}', space=vmem, size = 0x800, scoped, tag = 'input window, operand 0, single buffered']
    #allocation3 [shape = 's32[1]{0}', space=sflag, size = 0x4, scoped, tag = 'scoped memory for tpu_custom_call.1']
    #allocation4 [shape = 's32[1]{0}', space=sflag, size = 0x4, scoped, tag = 'scoped memory for tpu_custom_call.1']
    #allocation5 [shape = 'u8[4096]{0}', space=vmem, size = 0x1000, scoped, tag = 'input window, operand 1, single buffered']
    #allocation6 [shape = 's32[1]{0}', space=sflag, size = 0x4, scoped, tag = 'scoped memory for tpu_custom_call.1']
    #allocation7 [shape = 'u8[8192]{0}', space=vmem, size = 0x2000, scoped, tag = 'input window, operand 3, single buffered']
    #allocation8 [shape = 'u8[4096]{0}', space=vmem, size = 0x1000, scoped, tag = 'output window, operand 0, single buffered']
    %10 = vsyncpa [#allocation3], 0
    %11 = vsyncpa [#allocation6], 0
    %12 = vsyncpa [#allocation4], 0
    // Predicated region
    $region2: #{tpu_custom_call.1} parent=1 // pred_check
      _
    $region3: #{tpu_custom_call.1} parent=1 // pred_check_branch
      %14 = sbr.rel (0) target = $region5
    $region4: #{tpu_custom_call.1} parent=1 // pred_region
      %16 = vsyncadd [#allocation3], 0
      %s18 = sshll.u32 %s0, 4
      %s19 = int_to_ptr.hbm [resolvable:$true] %s18
      %s20 = sshll.u32 [#allocation2], 4
      %s21 = int_to_ptr.vmem [resolvable:$true] %s20
      %23 = dma.hbm_to_vmem [thread:$0]  %s19, 64, %s21, [#allocation3]
    $region5: #{tpu_custom_call.1} parent=1 // pred_fallthru
      _
    // Predicated region
    $region6: #{tpu_custom_call.1} parent=1 // pred_check
      _
    $region7: #{tpu_custom_call.1} parent=1 // pred_check_branch
      %25 = sbr.rel (0) target = $region9
    $region8: #{tpu_custom_call.1} parent=1 // pred_region
      %27 = vsyncadd [#allocation6], 0
      %s28 = sshll.u32 %s1, 4
      %s29 = int_to_ptr.hbm [resolvable:$true] %s28
      %s30 = sshll.u32 [#allocation5], 4
      %s31 = int_to_ptr.vmem [resolvable:$true] %s30
      %36 = dma.hbm_to_vmem [thread:$0]  %s29, 128, %s31, [#allocation6], 64, 64, 4
    $region9: #{tpu_custom_call.1} parent=1 // pred_fallthru
      _
    // Predicated region
    $region10: #{tpu_custom_call.1} parent=1 // pred_check
      _
    $region11: #{tpu_custom_call.1} parent=1 // pred_check_branch
      %38 = sbr.rel (0) target = $region13
    $region12: #{tpu_custom_call.1} parent=1 // pred_region
      _
    $region13: #{tpu_custom_call.1} parent=1 // pred_fallthru
      _
    // Predicated region
    $region14: #{tpu_custom_call.1} parent=1 // pred_check
      _
    $region15: #{tpu_custom_call.1} parent=1 // pred_check_branch
      %40 = sbr.rel (0) target = $region17
    $region16: #{tpu_custom_call.1} parent=1 // pred_region
      %42 = vsyncadd [#allocation6], 0
      %s43 = sshll.u32 %s3, 4
      %s44 = int_to_ptr.hbm [resolvable:$true] %s43
      %s45 = sshll.u32 [#allocation7], 4
      %s46 = int_to_ptr.vmem [resolvable:$true] %s45
      %51 = dma.hbm_to_vmem [thread:$0]  %s44, 256, %s46, [#allocation6], 64, 64, 4
    $region17: #{tpu_custom_call.1} parent=1 // pred_fallthru
      _
    // Predicated region
    $region18: #{tpu_custom_call.1} parent=1 // pred_check
      _
    $region19: #{tpu_custom_call.1} parent=1 // pred_check_branch
      %53 = sbr.rel (0) target = $region21
    $region20: #{tpu_custom_call.1} parent=1 // pred_region
      _
    $region21: #{tpu_custom_call.1} parent=1 // pred_fallthru
      _
    // Predicated region
    $region22: #{tpu_custom_call.1} parent=1 // pred_check
      _
    $region23: #{tpu_custom_call.1} parent=1 // pred_check_branch
      %55 = sbr.rel (0) target = $region25
    $region24: #{tpu_custom_call.1} parent=1 // pred_region
      %57 = dma.done [#allocation3], 64
    $region25: #{tpu_custom_call.1} parent=1 // pred_fallthru
      _
    // Predicated region
    $region26: #{tpu_custom_call.1} parent=1 // pred_check
      _
    $region27: #{tpu_custom_call.1} parent=1 // pred_check_branch
      %59 = sbr.rel (0) target = $region29
    $region28: #{tpu_custom_call.1} parent=1 // pred_region
      %61 = dma.done [#allocation6], 128
    $region29: #{tpu_custom_call.1} parent=1 // pred_fallthru
      _
    // Predicated region
    $region30: #{tpu_custom_call.1} parent=1 // pred_check
      _
    $region31: #{tpu_custom_call.1} parent=1 // pred_check_branch
      %63 = sbr.rel (0) target = $region33
    $region32: #{tpu_custom_call.1} parent=1 // pred_region
      %65 = dma.done [#allocation6], 256
    $region33: #{tpu_custom_call.1} parent=1 // pred_fallthru
      _
    %v67 = vld [vmem:[#allocation2] sm:$0xf]
    %v68 = vld [vmem:[#allocation5] sm:$0xf]
    %v69 = vld [vmem:[#allocation5 + $0x4] sm:$0xf]
    %v70 = vld [vmem:[%s2] sm:$0x1]
    %v72 = vperm.slane %v70, 0
    %v76 = vunpack.c.l.b16 %v68
    %v77 = vunpack.c.l.b16 %v69
    %v78 = vpack.c.b16 %v77, %v76
    %vm80 = vcmask 130048
    %v82 = vsel %vm80, %v67, 0
    %84 = vmatpush.bf16.msra.mxu0 0
    %85 = vmatpush.bf16.msra.mxu0 0
    %86 = vmatpush.bf16.msra.mxu0 0
    %87 = vmatpush.bf16.msra.mxu0 0
    %88 = vmatpush.bf16.msra.mxu0 0
    %89 = vmatpush.bf16.msra.mxu0 0
    %90 = vmatpush.bf16.msra.mxu0 0
    %91 = vmatpush.bf16.msra.mxu0 %v78
    %92 = vmatmul.bf16.gmra.mxu0 %v82
    %v93 = vpop.f32.mrf.mxu0
    %v94 = vadd.f32 %v72, %v93
    %v95 = vpop.f32.mrf.mxu0
    %96 = vdwg.mxu0
    %v97 = vmax.f32 %v94, 0.0
    %v98 = vpack.c.bf16 %v97, %v97
    %v99 = vld [vmem:[#allocation7] sm:$0xf]
    %v100 = vld [vmem:[#allocation7 + $0x4] sm:$0xf]
    %v101 = vld [vmem:[#allocation7 + $0x8] sm:$0xf]
    %v102 = vld [vmem:[#allocation7 + $0xc] sm:$0xf]
    %v103 = vld [vmem:[%s4] sm:$0x1]
    %v105 = vperm.slane %v103, 0
    %v111 = vunpack.c.l.b16 %v99
    %v112 = vunpack.c.l.b16 %v100
    %v113 = vunpack.c.l.b16 %v101
    %v114 = vunpack.c.l.b16 %v102
    %v115 = vpack.c.b16 %v112, %v111
    %v116 = vpack.c.b16 %v114, %v113
    %vm119 = vcmask 261120
    %v121 = vsel %vm119, %v98, 0
    %123 = vmatpush.bf16.msra.mxu0 0
    %124 = vmatpush.bf16.msra.mxu0 0
    %125 = vmatpush.bf16.msra.mxu0 0
    %126 = vmatpush.bf16.msra.mxu0 0
    %127 = vmatpush.bf16.msra.mxu0 0
    %128 = vmatpush.bf16.msra.mxu0 0
    %129 = vmatpush.bf16.msra.mxu0 %v116
    %130 = vmatpush.bf16.msra.mxu0 %v115
    %131 = vmatmul.bf16.gmra.mxu0 %v121
    %v132 = vpop.f32.mrf.mxu0
    %v133 = vadd.f32 %v105, %v132
    %v134 = vpop.f32.mrf.mxu0
    %135 = vdwg.mxu0
    %136 = vmax.xlane.f32.xlu0 %v133
    %v137 = vpop.xlane.xlu0 %136
    %v138 = vsub.f32 %v133, %v137
    %v139 = vmul.f32 %v138, 1.442695
    %v140 = vpow.pop %v139
    %141 = vadd.xlane.f32.xlu0 %v140
    %v142 = vpop.xlane.xlu0 %141
    %v143 = vrcp.pop %v142
    %v144 = vmul.f32 %v140, %v143
    %145 = vst [vmem:[#allocation8] sm:$0xff] %v144
    // Predicated region
    $region34: #{tpu_custom_call.1} parent=1 // pred_check
      _
    $region35: #{tpu_custom_call.1} parent=1 // pred_check_branch
      %147 = sbr.rel (0) target = $region37
    $region36: #{tpu_custom_call.1} parent=1 // pred_region
      %149 = vsyncadd [#allocation4], 0
      %s151 = sshll.u32 [#allocation8], 4
      %s152 = int_to_ptr.vmem [resolvable:$true] %s151
      %s153 = sshll.u32 %s5, 4
      %s154 = int_to_ptr.hbm [resolvable:$true] %s153
      %156 = dma.vmem_to_hbm [thread:$0]  %s152, 128, %s154, [#allocation4]
    $region37: #{tpu_custom_call.1} parent=1 // pred_fallthru
      _
    // Predicated region
    $region38: #{tpu_custom_call.1} parent=1 // pred_check
      _
    $region39: #{tpu_custom_call.1} parent=1 // pred_check_branch
      %158 = sbr.rel (0) target = $region41
    $region40: #{tpu_custom_call.1} parent=1 // pred_region
      %160 = dma.done [#allocation4], 128
    $region41: #{tpu_custom_call.1} parent=1 // pred_fallthru
      _
    %161 = vsyncpa [#allocation3], 1
    %162 = vsyncpa [#allocation6], 1
    %163 = vsyncpa [#allocation4], 1

</llo_original>
